<compile_context>
chip_gen: v6e
topology: v6e:2x2x1
jax: 0.10.0
libtpu: 0.0.40
codegen_flags: <defaults>
</compile_context>

<pallas_src>
import functools

import jax
import jax.numpy as jnp
from jax import lax
from jax.experimental import pallas as pl
from jax.experimental.pallas import tpu as pltpu


# --------------------------------------------------------------------------
# Tiling policy
# --------------------------------------------------------------------------

_TARGET_STREAM_BYTES = 8 << 20   # ~8 MiB of x per grid step (enough for v7x @ 3.2 TB/s)
_VMEM_TILE_BUDGET = 44 << 20     # double-buffered x + out tiles, headroom under v7x's 64 MiB
_VMEM_LIMIT_CAP = 48 << 20       # never ask for more scoped VMEM than v7x can give


def _round_up(v, m):
    return ((v + m - 1) // m) * m


def _choose_block_m(num_rows, stream_row_bytes, vmem_row_bytes):
    """Pick the batch-tile row count (in whatever row unit the caller uses)."""
    tm = max(8, _TARGET_STREAM_BYTES // stream_row_bytes)          # HBM amortization target
    tm = min(tm, max(8, _VMEM_TILE_BUDGET // vmem_row_bytes))      # VMEM cap
    # Keep >= 2 grid steps so v7x's two TensorCores both get work on the
    # "parallel" batch axis (harmless on single-TC v5e/v6e).
    tm = min(tm, _round_up(-(-num_rows // 2), 8))
    if tm >= num_rows:
        return num_rows                                            # single full block
    return max(8, (tm // 8) * 8)                                   # multiple of 8


# --------------------------------------------------------------------------
# Kernels
# --------------------------------------------------------------------------

def _perceptron_packed_kernel(k_out, x_ref, w_ref, b_ref, o_ref):
    # x_ref: (tm, KP) VMEM lane-dense packed rows (KP = pack*F, multiple of 128)
    # w_ref: (KP, NC) VMEM block-diagonal weight; only the first k_out columns
    #        are non-zero (column j holds w for the j-th F-wide segment).
    # b_ref: (1, 1) SMEM scalar bias
    # o_ref: (tm, k_out) VMEM
    acc = jnp.dot(x_ref[...], w_ref[...],
                  preferred_element_type=jnp.float32,
                  precision=lax.Precision.HIGHEST)       # MXU segmented reduce, full f32
    o_ref[...] = (acc[:, :k_out] + b_ref[0, 0]).astype(o_ref.dtype)


def _perceptron_rowwise_kernel(x_ref, w_ref, b_ref, o_ref):
    # Fallback for feature widths that cannot be lane-packed.
    # x_ref: (tm, F) VMEM, w_ref: (1, F) VMEM, b_ref: (1, 1) SMEM, o_ref: (tm, 1)
    prod = x_ref[...] * w_ref[...]                       # VPU broadcast multiply
    acc = jnp.sum(prod, axis=-1, keepdims=True)          # XLU lane reduce -> (tm, 1)
    o_ref[...] = (acc + b_ref[0, 0]).astype(o_ref.dtype)


# --------------------------------------------------------------------------
# Wrappers
# --------------------------------------------------------------------------

def _forward_packed(x, w, b):
    """F < 128 and 128 % F == 0: lane-dense repack + MXU block-diagonal reduce."""
    B, F = x.shape
    itemsize = jnp.dtype(x.dtype).itemsize

    pack = 256 // F                                # original rows per packed row
    kp = pack * F                                  # packed row width (= 256, fills MXU depth)
    ncols = _round_up(max(pack, 128), 128)         # weight width: MXU-friendly, >= 128

    # Pad the batch (only when needed) so the packed view has whole 8-row groups.
    b_pad = _round_up(B, 8 * pack)
    if b_pad != B:
        x = jnp.pad(x, ((0, b_pad - B), (0, 0)))   # padded rows are sliced off below
    xp = x.reshape(b_pad // pack, kp)              # contiguous reshape: free
    bp_rows = b_pad // pack

    # Block-diagonal weight: w_bd[j*F:(j+1)*F, j] = w; zero elsewhere.
    w_bd = jnp.kron(jnp.eye(pack, dtype=x.dtype), w.reshape(F, 1).astype(x.dtype))
    w_bd = jnp.pad(w_bd, ((0, 0), (0, ncols - pack)))

    stream_row_bytes = kp * itemsize                                   # HBM bytes per packed row
    vmem_row_bytes = 2 * kp * itemsize + 2 * _round_up(pack, 128) * itemsize  # db x + db out (lane-padded)
    tm = _choose_block_m(bp_rows, stream_row_bytes, vmem_row_bytes)

    needed = tm * vmem_row_bytes + 2 * kp * ncols * itemsize
    vmem_limit = min(_VMEM_LIMIT_CAP, max(16 << 20, needed + (4 << 20)))

    out_p = pl.pallas_call(
        functools.partial(_perceptron_packed_kernel, pack),
        out_shape=jax.ShapeDtypeStruct((bp_rows, pack), x.dtype),
        grid_spec=pltpu.PrefetchScalarGridSpec(
            num_scalar_prefetch=0,
            grid=(pl.cdiv(bp_rows, tm),),
            in_specs=[
                pl.BlockSpec((tm, kp), lambda i: (i, 0)),               # packed x tile
                pl.BlockSpec((kp, ncols), lambda i: (0, 0)),            # block-diag weight, resident
                pl.BlockSpec(memory_space=pltpu.MemorySpace.SMEM),      # bias scalar in SMEM
            ],
            out_specs=pl.BlockSpec((tm, pack), lambda i: (i, 0)),
        ),
        compiler_params=pltpu.CompilerParams(
            dimension_semantics=("parallel",),     # shard batch grid over v7x's 2 TCs
            vmem_limit_bytes=vmem_limit,
        ),
    )(xp, w_bd, b)

    return out_p.reshape(b_pad, 1)[:B]


def _forward_rowwise(x, w, b):
    """Fallback (F >= 128 or 128 % F != 0): VPU broadcast multiply + XLU lane reduce."""
    B, F = x.shape
    itemsize = jnp.dtype(x.dtype).itemsize
    lane_f = _round_up(F, 128)                     # correct lane padding for any F

    stream_row_bytes = F * itemsize
    vmem_row_bytes = 2 * lane_f * itemsize + 2 * 128 * itemsize
    tm = _choose_block_m(B, stream_row_bytes, vmem_row_bytes)

    needed = tm * vmem_row_bytes + 2 * 8 * lane_f * itemsize
    vmem_limit = min(_VMEM_LIMIT_CAP, max(16 << 20, needed + (4 << 20)))

    return pl.pallas_call(
        _perceptron_rowwise_kernel,
        out_shape=jax.ShapeDtypeStruct((B, 1), x.dtype),
        grid_spec=pltpu.PrefetchScalarGridSpec(
            num_scalar_prefetch=0,
            grid=(pl.cdiv(B, tm),),
            in_specs=[
                pl.BlockSpec((tm, F), lambda i: (i, 0)),
                pl.BlockSpec((1, F), lambda i: (0, 0)),
                pl.BlockSpec(memory_space=pltpu.MemorySpace.SMEM),
            ],
            out_specs=pl.BlockSpec((tm, 1), lambda i: (i, 0)),
        ),
        compiler_params=pltpu.CompilerParams(
            dimension_semantics=("parallel",),
            vmem_limit_bytes=vmem_limit,
        ),
    )(x, w, b)


@functools.partial(jax.jit, static_argnames=("allow_xla_shortcut",))
def perceptron_forward(x, w, b, *, allow_xla_shortcut=True):
    """y = x @ w.T + b.  x: (B, F) f32, w: (1, F) (PyTorch nn.Linear layout), b: (1, 1)."""
    B, F = x.shape
    itemsize = jnp.dtype(x.dtype).itemsize

    # Tiny inputs: fixed launch/grid overhead dominates; plain XLA is faster and fuses.
    if allow_xla_shortcut and B * F * itemsize < (1 << 20):
        return jnp.dot(x, w.T, precision=lax.Precision.HIGHEST) + b

    if F < 128 and 128 % F == 0:
        return _forward_packed(x, w, b)
    return _forward_rowwise(x, w, b)


def init_linear_params(key, num_inputs):
    """Deterministic init mimicking nn.Linear's uniform(-1/sqrt(fan_in), 1/sqrt(fan_in)).

    Weight kept in PyTorch layout (out_features, in_features) = (1, F).
    """
    kw, kb = jax.random.split(key)
    bound = 1.0 / jnp.sqrt(jnp.float32(num_inputs))
    w = jax.random.uniform(kw, (1, num_inputs), jnp.float32, -bound, bound)
    b = jax.random.uniform(kb, (1, 1), jnp.float32, -bound, bound)
    return w, b


if __name__ == "__main__":
    # TODO(synk): the data_reader / pandas preprocessing, ASGD training loop and
    # evaluation logic from the PyTorch module are host-side data plumbing, not
    # forward compute, and are intentionally not translated.
    key = jax.random.PRNGKey(0)
    k_x, k_p, k_x2, k_x3, k_p3 = jax.random.split(key, 5)

    num_inputs = 32  # stand-in for data_reader.get_num_inputs()
    w, b = init_linear_params(k_p, num_inputs)

    # Small-shape check (packed path, single grid step). Shortcut disabled so the
    # Pallas kernel actually runs at this small size.
    batch = 16
    x = jax.random.normal(k_x, (batch, num_inputs), jnp.float32)
    y = jax.block_until_ready(perceptron_forward(x, w, b, allow_xla_shortcut=False))
    y_ref = jnp.dot(x, w.T, precision=lax.Precision.HIGHEST) + b
    assert y.shape == (batch, 1)
    assert jnp.allclose(y, y_ref, atol=1e-4, rtol=1e-4)

    # Multi-step grid + batch-padding check (B not a multiple of the pack factor).
    batch2 = 1000
    x2 = jax.random.normal(k_x2, (batch2, num_inputs), jnp.float32)
    y2 = jax.block_until_ready(perceptron_forward(x2, w, b, allow_xla_shortcut=False))
    y2_ref = jnp.dot(x2, w.T, precision=lax.Precision.HIGHEST) + b
    assert y2.shape == (batch2, 1)
    assert jnp.allclose(y2, y2_ref, atol=1e-4, rtol=1e-4)

    # Fallback row-wise path check with a non-packable feature width.
    batch3, feat3 = 64, 200
    w3, b3 = init_linear_params(k_p3, feat3)
    x3 = jax.random.normal(k_x3, (batch3, feat3), jnp.float32)
    y3 = jax.block_until_ready(perceptron_forward(x3, w3, b3, allow_xla_shortcut=False))
    y3_ref = jnp.dot(x3, w3.T, precision=lax.Precision.HIGHEST) + b3
    assert y3.shape == (batch3, 1)
    assert jnp.allclose(y3, y3_ref, atol=1e-4, rtol=1e-4)

    print("KERNEL_OK")
</pallas_src>

<mosaic_0001>
module attributes {stable_mosaic.version = 11 : i64} {
  func.func @_perceptron_packed_kernel(%arg0: i32, %arg1: memref<8x256xf32, #tpu.memory_space<vmem>>, %arg2: memref<256x128xf32, #tpu.memory_space<vmem>>, %arg3: memref<1x1xf32, #tpu.memory_space<smem>>, %arg4: memref<8x8xf32, #tpu.memory_space<vmem>>) attributes {dimension_semantics = [#tpu.dimension_semantics<parallel>], iteration_bounds = array<i64: 1>, scalar_prefetch = 0 : i64, scratch_operands = 0 : i64, tpu.core_type = #tpu.core_type<tc>, window_params = [{transform_indices = @transform_0, window_bounds = array<i64: 8, 256>}, {pipeline_mode = #tpu.pipeline_mode<synchronous>, transform_indices = @transform_1, window_bounds = array<i64: 256, 128>}, {transform_indices = @transform_2, window_bounds = array<i64: 1, 1>}, {transform_indices = @transform_3, window_bounds = array<i64: 8, 8>}]} {
    %c0 = arith.constant 0 : index
    %c0_0 = arith.constant 0 : index
    %0 = vector.load %arg1[%c0, %c0_0] : memref<8x256xf32, #tpu.memory_space<vmem>>, vector<8x256xf32>
    %c0_1 = arith.constant 0 : index
    %c0_2 = arith.constant 0 : index
    %1 = vector.load %arg2[%c0_1, %c0_2] : memref<256x128xf32, #tpu.memory_space<vmem>>, vector<256x128xf32>
    %cst = arith.constant dense<0.000000e+00> : vector<8x128xf32>
    %2 = tpu.matmul %0, %1, %cst {dimension_numbers = #tpu.dot_dimension_numbers<[1], [0], [0], [1], [0, 0, 1, 1], [], []>, precision = #tpu.contract_precision<fp32>} : vector<8x256xf32>, vector<256x128xf32>, vector<8x128xf32> -> vector<8x128xf32>
    %3 = vector.extract_strided_slice %2 {offsets = [0, 0], sizes = [8, 8], strides = [1, 1]} : vector<8x128xf32> to vector<8x8xf32>
    %c0_3 = arith.constant 0 : index
    %c0_4 = arith.constant 0 : index
    %4 = memref.load %arg3[%c0_3, %c0_4] : memref<1x1xf32, #tpu.memory_space<smem>>
    %5 = vector.broadcast %4 : f32 to vector<8x8xf32>
    %6 = arith.addf %3, %5 : vector<8x8xf32>
    %c0_5 = arith.constant 0 : index
    %c0_6 = arith.constant 0 : index
    %7 = vector.load %arg4[%c0_5, %c0_6] : memref<8x8xf32, #tpu.memory_space<vmem>>, vector<8x8xf32>
    tpu.vector_store %arg4[%c0_5, %c0_6], %6 {strides = array<i32>} : memref<8x8xf32, #tpu.memory_space<vmem>>, vector<8x8xf32>,
    return
  }
  func.func @transform_0(%arg0: i32) -> (i32, i32) {
    %c0_i32 = arith.constant 0 : i32
    %c0_i32_0 = arith.constant 0 : i32
    return %arg0, %c0_i32 : i32, i32
  }
  func.func @transform_1(%arg0: i32) -> (i32, i32) {
    %c0_i32 = arith.constant 0 : i32
    %c0_i32_0 = arith.constant 0 : i32
    %c0_i32_1 = arith.constant 0 : i32
    return %c0_i32, %c0_i32_0 : i32, i32
  }
  func.func @transform_2(%arg0: i32) -> (i32, i32) {
    %c0_i32 = arith.constant 0 : i32
    %c0_i32_0 = arith.constant 0 : i32
    %c0_i32_1 = arith.constant 0 : i32
    return %c0_i32, %c0_i32_0 : i32, i32
  }
  func.func @transform_3(%arg0: i32) -> (i32, i32) {
    %c0_i32 = arith.constant 0 : i32
    %c0_i32_0 = arith.constant 0 : i32
    return %arg0, %c0_i32 : i32, i32
  }
}

</mosaic_0001>

<llo_original>
// kernel: perceptron_forward.1
$region0: #{perceptron_forward.1}
  #allocation0 [shape = 'u32[]', space=smem, size = 0x4, offset = 0x4, fixed_abs, tag = 'smem constant byte address 0x4 - core index']
  #allocation1 [shape = 'u32[144,128]{1,0:T(1,128)}', space=vmem, size = 0x12000, scoped, tag = 'internal scratch']
  #allocation2 [shape = 'f32[1,1]{1,0:T(1,128)S(6)}', space=smem, size = 0x200, scoped, tag = 'scoped memory for perceptron_forward.1']
  %s0 = inlined_call_operand.vmem [shape: f32[8,256], index: 0, kind: input, shape index: {}]
  %s1 = inlined_call_operand.vmem [shape: f32[256,128], index: 1, kind: input, shape index: {}]
  %s2 = inlined_call_operand.<no memory space> [shape: f32[1,1], index: 2, kind: input, shape index: {}]
  %s3 = inlined_call_operand.vmem [shape: f32[8,8], index: 3, kind: output, shape index: {}]
  %s4 = sld [smem:[#allocation0]]
  $region22: #{perceptron_forward.1} parent=0
    _
  %s6 = ssub.s32 1, %s4
  %s7 = scalar_select 0, %s6, %s4
  %8 = sst [smem:[#allocation2]] %s2
  // Predicated region
  $region2: #{perceptron_forward.1} parent=0 // pred_check
    _
  $region3: #{perceptron_forward.1} parent=0 // pred_check_branch
    %10 = sbr.rel (0) target = $region5
  $region4: #{perceptron_forward.1} parent=0 // pred_region
    _
  $region5: #{perceptron_forward.1} parent=0 // pred_fallthru
    _
  // Predicated region
  $region6: #{perceptron_forward.1} parent=0 // pred_check
    _
  $region7: #{perceptron_forward.1} parent=0 // pred_check_branch
    %12 = sbr.rel (0) target = $region9
  $region8: #{perceptron_forward.1} parent=0 // pred_region
    _
  $region9: #{perceptron_forward.1} parent=0 // pred_fallthru
    _
  // Predicated region
  $region10: #{perceptron_forward.1} parent=0 // pred_check
    _
  $region11: #{perceptron_forward.1} parent=0 // pred_check_branch
    %14 = sbr.rel (0) target = $region13
  $region12: #{perceptron_forward.1} parent=0 // pred_region
    _
  $region13: #{perceptron_forward.1} parent=0 // pred_fallthru
    _
  %v15 = vld [vmem:[%s0] sm:$0xff]
  %v16 = vld [vmem:[%s0 + $0x8] sm:$0xff]
  %v17 = vld [vmem:[%s1] sm:$0xff]
  %v18 = vld [vmem:[%s1 + $0x8] sm:$0xff]
  %v19 = vld [vmem:[%s1 + $0x10] sm:$0xff]
  %v20 = vld [vmem:[%s1 + $0x18] sm:$0xff]
  %v21 = vld [vmem:[%s1 + $0x20] sm:$0xff]
  %v22 = vld [vmem:[%s1 + $0x28] sm:$0xff]
  %v23 = vld [vmem:[%s1 + $0x30] sm:$0xff]
  %v24 = vld [vmem:[%s1 + $0x38] sm:$0xff]
  %v25 = vld [vmem:[%s1 + $0x40] sm:$0xff]
  %v26 = vld [vmem:[%s1 + $0x48] sm:$0xff]
  %v27 = vld [vmem:[%s1 + $0x50] sm:$0xff]
  %v28 = vld [vmem:[%s1 + $0x58] sm:$0xff]
  %v29 = vld [vmem:[%s1 + $0x60] sm:$0xff]
  %v30 = vld [vmem:[%s1 + $0x68] sm:$0xff]
  %v31 = vld [vmem:[%s1 + $0x70] sm:$0xff]
  %v32 = vld [vmem:[%s1 + $0x78] sm:$0xff]
  %v33 = vld [vmem:[%s1 + $0x80] sm:$0xff]
  %v34 = vld [vmem:[%s1 + $0x88] sm:$0xff]
  %v35 = vld [vmem:[%s1 + $0x90] sm:$0xff]
  %v36 = vld [vmem:[%s1 + $0x98] sm:$0xff]
  %v37 = vld [vmem:[%s1 + $0xa0] sm:$0xff]
  %v38 = vld [vmem:[%s1 + $0xa8] sm:$0xff]
  %v39 = vld [vmem:[%s1 + $0xb0] sm:$0xff]
  %v40 = vld [vmem:[%s1 + $0xb8] sm:$0xff]
  %v41 = vld [vmem:[%s1 + $0xc0] sm:$0xff]
  %v42 = vld [vmem:[%s1 + $0xc8] sm:$0xff]
  %v43 = vld [vmem:[%s1 + $0xd0] sm:$0xff]
  %v44 = vld [vmem:[%s1 + $0xd8] sm:$0xff]
  %v45 = vld [vmem:[%s1 + $0xe0] sm:$0xff]
  %v46 = vld [vmem:[%s1 + $0xe8] sm:$0xff]
  %v47 = vld [vmem:[%s1 + $0xf0] sm:$0xff]
  %v48 = vld [vmem:[%s1 + $0xf8] sm:$0xff]
  %49 = vmatprep.subr.mxu0 0.0
  %v50 = vand.u32 %v32, 4294901760
  %51 = vmatpush1.msra.mxu0 %v50
  %52 = vmatprep.subr.mxu0 0.0
  %v53 = vand.u32 %v31, 4294901760
  %54 = vmatpush1.msra.mxu0 %v53
  %55 = vmatprep.subr.mxu0 0.0
  %v56 = vand.u32 %v30, 4294901760
  %57 = vmatpush1.msra.mxu0 %v56
  %58 = vmatprep.subr.mxu0 0.0
  %v59 = vand.u32 %v29, 4294901760
  %60 = vmatpush1.msra.mxu0 %v59
  %61 = vmatprep.subr.mxu0 0.0
  %v62 = vand.u32 %v28, 4294901760
  %63 = vmatpush1.msra.mxu0 %v62
  %64 = vmatprep.subr.mxu0 0.0
  %v65 = vand.u32 %v27, 4294901760
  %66 = vmatpush1.msra.mxu0 %v65
  %67 = vmatprep.subr.mxu0 0.0
  %v68 = vand.u32 %v26, 4294901760
  %69 = vmatpush1.msra.mxu0 %v68
  %70 = vmatprep.subr.mxu0 0.0
  %v71 = vand.u32 %v25, 4294901760
  %72 = vmatpush1.msra.mxu0 %v71
  %73 = vmatprep.subr.mxu0 0.0
  %v74 = vand.u32 %v24, 4294901760
  %75 = vmatpush1.msra.mxu0 %v74
  %76 = vmatprep.subr.mxu0 0.0
  %v77 = vand.u32 %v23, 4294901760
  %78 = vmatpush1.msra.mxu0 %v77
  %79 = vmatprep.subr.mxu0 0.0
  %v80 = vand.u32 %v22, 4294901760
  %81 = vmatpush1.msra.mxu0 %v80
  %82 = vmatprep.subr.mxu0 0.0
  %v83 = vand.u32 %v21, 4294901760
  %84 = vmatpush1.msra.mxu0 %v83
  %85 = vmatprep.subr.mxu0 0.0
  %v86 = vand.u32 %v20, 4294901760
  %87 = vmatpush1.msra.mxu0 %v86
  %88 = vmatprep.subr.mxu0 0.0
  %v89 = vand.u32 %v19, 4294901760
  %90 = vmatpush1.msra.mxu0 %v89
  %91 = vmatprep.subr.mxu0 0.0
  %v92 = vand.u32 %v18, 4294901760
  %93 = vmatpush1.msra.mxu0 %v92
  %94 = vmatprep.subr.mxu0 0.0
  %v95 = vand.u32 %v17, 4294901760
  %96 = vmatpush1.msra.mxu0 %v95
  %97 = vmatprep.subr.mxu0 0.0
  %v98 = vand.u32 %v48, 4294901760
  %99 = vmatpush2.msra.mxu0 %v98
  %100 = vmatprep.subr.mxu0 0.0
  %v101 = vand.u32 %v47, 4294901760
  %102 = vmatpush2.msra.mxu0 %v101
  %103 = vmatprep.subr.mxu0 0.0
  %v104 = vand.u32 %v46, 4294901760
  %105 = vmatpush2.msra.mxu0 %v104
  %106 = vmatprep.subr.mxu0 0.0
  %v107 = vand.u32 %v45, 4294901760
  %108 = vmatpush2.msra.mxu0 %v107
  %109 = vmatprep.subr.mxu0 0.0
  %v110 = vand.u32 %v44, 4294901760
  %111 = vmatpush2.msra.mxu0 %v110
  %112 = vmatprep.subr.mxu0 0.0
  %v113 = vand.u32 %v43, 4294901760
  %114 = vmatpush2.msra.mxu0 %v113
  %115 = vmatprep.subr.mxu0 0.0
  %v116 = vand.u32 %v42, 4294901760
  %117 = vmatpush2.msra.mxu0 %v116
  %118 = vmatprep.subr.mxu0 0.0
  %v119 = vand.u32 %v41, 4294901760
  %120 = vmatpush2.msra.mxu0 %v119
  %121 = vmatprep.subr.mxu0 0.0
  %v122 = vand.u32 %v40, 4294901760
  %123 = vmatpush2.msra.mxu0 %v122
  %124 = vmatprep.subr.mxu0 0.0
  %v125 = vand.u32 %v39, 4294901760
  %126 = vmatpush2.msra.mxu0 %v125
  %127 = vmatprep.subr.mxu0 0.0
  %v128 = vand.u32 %v38, 4294901760
  %129 = vmatpush2.msra.mxu0 %v128
  %130 = vmatprep.subr.mxu0 0.0
  %v131 = vand.u32 %v37, 4294901760
  %132 = vmatpush2.msra.mxu0 %v131
  %133 = vmatprep.subr.mxu0 0.0
  %v134 = vand.u32 %v36, 4294901760
  %135 = vmatpush2.msra.mxu0 %v134
  %136 = vmatprep.subr.mxu0 0.0
  %v137 = vand.u32 %v35, 4294901760
  %138 = vmatpush2.msra.mxu0 %v137
  %139 = vmatprep.subr.mxu0 0.0
  %v140 = vand.u32 %v34, 4294901760
  %141 = vmatpush2.msra.mxu0 %v140
  %142 = vmatprep.subr.mxu0 0.0
  %v143 = vand.u32 %v33, 4294901760
  %144 = vmatpush2.msra.mxu0 %v143
  %v145 = vand.u32 %v16, 4294901760
  %v146 = vsub.f32 %v16, %v145
  %v147 = vand.u32 %v146, 4294901760
  %v148 = vsub.f32 %v146, %v147
  %v149 = vand.u32 %v148, 4294901760
  %150 = vmatprep.mubr.f32.mxu0 %v149
  %v151 = vand.u32 %v15, 4294901760
  %v152 = vsub.f32 %v15, %v151
  %v153 = vand.u32 %v152, 4294901760
  %v154 = vsub.f32 %v152, %v153
  %v155 = vand.u32 %v154, 4294901760
  %156 = vmatmul.mubr.f32.gmra.mxu0 %v155
  %v157 = vpop.f32.mrf.mxu0
  %v158 = vadd.f32 0.0, %v157
  %v159 = vpop.f32.mrf.mxu0
  %160 = vdwg.mxu0
  %161 = vmatprep.subr.mxu0 0.0
  %v162 = vand.u32 %v32, 4294901760
  %v163 = vsub.f32 %v32, %v162
  %v164 = vand.u32 %v163, 4294901760
  %v165 = vsub.f32 %v163, %v164
  %v166 = vand.u32 %v165, 4294901760
  %167 = vmatpush1.msra.mxu0 %v166
  %168 = vmatprep.subr.mxu0 0.0
  %v169 = vand.u32 %v31, 4294901760
  %v170 = vsub.f32 %v31, %v169
  %v171 = vand.u32 %v170, 4294901760
  %v172 = vsub.f32 %v170, %v171
  %v173 = vand.u32 %v172, 4294901760
  %174 = vmatpush1.msra.mxu0 %v173
  %175 = vmatprep.subr.mxu0 0.0
  %v176 = vand.u32 %v30, 4294901760
  %v177 = vsub.f32 %v30, %v176
  %v178 = vand.u32 %v177, 4294901760
  %v179 = vsub.f32 %v177, %v178
  %v180 = vand.u32 %v179, 4294901760
  %181 = vmatpush1.msra.mxu0 %v180
  %182 = vmatprep.subr.mxu0 0.0
  %v183 = vand.u32 %v29, 4294901760
  %v184 = vsub.f32 %v29, %v183
  %v185 = vand.u32 %v184, 4294901760
  %v186 = vsub.f32 %v184, %v185
  %v187 = vand.u32 %v186, 4294901760
  %188 = vmatpush1.msra.mxu0 %v187
  %189 = vmatprep.subr.mxu0 0.0
  %v190 = vand.u32 %v28, 4294901760
  %v191 = vsub.f32 %v28, %v190
  %v192 = vand.u32 %v191, 4294901760
  %v193 = vsub.f32 %v191, %v192
  %v194 = vand.u32 %v193, 4294901760
  %195 = vmatpush1.msra.mxu0 %v194
  %196 = vmatprep.subr.mxu0 0.0
  %v197 = vand.u32 %v27, 4294901760
  %v198 = vsub.f32 %v27, %v197
  %v199 = vand.u32 %v198, 4294901760
  %v200 = vsub.f32 %v198, %v199
  %v201 = vand.u32 %v200, 4294901760
  %202 = vmatpush1.msra.mxu0 %v201
  %203 = vmatprep.subr.mxu0 0.0
  %v204 = vand.u32 %v26, 4294901760
  %v205 = vsub.f32 %v26, %v204
  %v206 = vand.u32 %v205, 4294901760
  %v207 = vsub.f32 %v205, %v206
  %v208 = vand.u32 %v207, 4294901760
  %209 = vmatpush1.msra.mxu0 %v208
  %210 = vmatprep.subr.mxu0 0.0
  %v211 = vand.u32 %v25, 4294901760
  %v212 = vsub.f32 %v25, %v211
  %v213 = vand.u32 %v212, 4294901760
  %v214 = vsub.f32 %v212, %v213
  %v215 = vand.u32 %v214, 4294901760
  %216 = vmatpush1.msra.mxu0 %v215
  %217 = vmatprep.subr.mxu0 0.0
  %v218 = vand.u32 %v24, 4294901760
  %v219 = vsub.f32 %v24, %v218
  %v220 = vand.u32 %v219, 4294901760
  %v221 = vsub.f32 %v219, %v220
  %v222 = vand.u32 %v221, 4294901760
  %223 = vmatpush1.msra.mxu0 %v222
  %224 = vmatprep.subr.mxu0 0.0
  %v225 = vand.u32 %v23, 4294901760
  %v226 = vsub.f32 %v23, %v225
  %v227 = vand.u32 %v226, 4294901760
  %v228 = vsub.f32 %v226, %v227
  %v229 = vand.u32 %v228, 4294901760
  %230 = vmatpush1.msra.mxu0 %v229
  %231 = vmatprep.subr.mxu0 0.0
  %v232 = vand.u32 %v22, 4294901760
  %v233 = vsub.f32 %v22, %v232
  %v234 = vand.u32 %v233, 4294901760
  %v235 = vsub.f32 %v233, %v234
  %v236 = vand.u32 %v235, 4294901760
  %237 = vmatpush1.msra.mxu0 %v236
  %238 = vmatprep.subr.mxu0 0.0
  %v239 = vand.u32 %v21, 4294901760
  %v240 = vsub.f32 %v21, %v239
  %v241 = vand.u32 %v240, 4294901760
  %v242 = vsub.f32 %v240, %v241
  %v243 = vand.u32 %v242, 4294901760
  %244 = vmatpush1.msra.mxu0 %v243
  %245 = vmatprep.subr.mxu0 0.0
  %v246 = vand.u32 %v20, 4294901760
  %v247 = vsub.f32 %v20, %v246
  %v248 = vand.u32 %v247, 4294901760
  %v249 = vsub.f32 %v247, %v248
  %v250 = vand.u32 %v249, 4294901760
  %251 = vmatpush1.msra.mxu0 %v250
  %252 = vmatprep.subr.mxu0 0.0
  %v253 = vand.u32 %v19, 4294901760
  %v254 = vsub.f32 %v19, %v253
  %v255 = vand.u32 %v254, 4294901760
  %v256 = vsub.f32 %v254, %v255
  %v257 = vand.u32 %v256, 4294901760
  %258 = vmatpush1.msra.mxu0 %v257
  %259 = vmatprep.subr.mxu0 0.0
  %v260 = vand.u32 %v18, 4294901760
  %v261 = vsub.f32 %v18, %v260
  %v262 = vand.u32 %v261, 4294901760
  %v263 = vsub.f32 %v261, %v262
  %v264 = vand.u32 %v263, 4294901760
  %265 = vmatpush1.msra.mxu0 %v264
  %266 = vmatprep.subr.mxu0 0.0
  %v267 = vand.u32 %v17, 4294901760
  %v268 = vsub.f32 %v17, %v267
  %v269 = vand.u32 %v268, 4294901760
  %v270 = vsub.f32 %v268, %v269
  %v271 = vand.u32 %v270, 4294901760
  %272 = vmatpush1.msra.mxu0 %v271
  %273 = vmatprep.subr.mxu0 0.0
  %v274 = vand.u32 %v48, 4294901760
  %v275 = vsub.f32 %v48, %v274
  %v276 = vand.u32 %v275, 4294901760
  %v277 = vsub.f32 %v275, %v276
  %v278 = vand.u32 %v277, 4294901760
  %279 = vmatpush2.msra.mxu0 %v278
  %280 = vmatprep.subr.mxu0 0.0
  %v281 = vand.u32 %v47, 4294901760
  %v282 = vsub.f32 %v47, %v281
  %v283 = vand.u32 %v282, 4294901760
  %v284 = vsub.f32 %v282, %v283
  %v285 = vand.u32 %v284, 4294901760
  %286 = vmatpush2.msra.mxu0 %v285
  %287 = vmatprep.subr.mxu0 0.0
  %v288 = vand.u32 %v46, 4294901760
  %v289 = vsub.f32 %v46, %v288
  %v290 = vand.u32 %v289, 4294901760
  %v291 = vsub.f32 %v289, %v290
  %v292 = vand.u32 %v291, 4294901760
  %293 = vmatpush2.msra.mxu0 %v292
  %294 = vmatprep.subr.mxu0 0.0
  %v295 = vand.u32 %v45, 4294901760
  %v296 = vsub.f32 %v45, %v295
  %v297 = vand.u32 %v296, 4294901760
  %v298 = vsub.f32 %v296, %v297
  %v299 = vand.u32 %v298, 4294901760
  %300 = vmatpush2.msra.mxu0 %v299
  %301 = vmatprep.subr.mxu0 0.0
  %v302 = vand.u32 %v44, 4294901760
  %v303 = vsub.f32 %v44, %v302
  %v304 = vand.u32 %v303, 4294901760
  %v305 = vsub.f32 %v303, %v304
  %v306 = vand.u32 %v305, 4294901760
  %307 = vmatpush2.msra.mxu0 %v306
  %308 = vmatprep.subr.mxu0 0.0
  %v309 = vand.u32 %v43, 4294901760
  %v310 = vsub.f32 %v43, %v309
  %v311 = vand.u32 %v310, 4294901760
  %v312 = vsub.f32 %v310, %v311
  %v313 = vand.u32 %v312, 4294901760
  %314 = vmatpush2.msra.mxu0 %v313
  %315 = vmatprep.subr.mxu0 0.0
  %v316 = vand.u32 %v42, 4294901760
  %v317 = vsub.f32 %v42, %v316
  %v318 = vand.u32 %v317, 4294901760
  %v319 = vsub.f32 %v317, %v318
  %v320 = vand.u32 %v319, 4294901760
  %321 = vmatpush2.msra.mxu0 %v320
  %322 = vmatprep.subr.mxu0 0.0
  %v323 = vand.u32 %v41, 4294901760
  %v324 = vsub.f32 %v41, %v323
  %v325 = vand.u32 %v324, 4294901760
  %v326 = vsub.f32 %v324, %v325
  %v327 = vand.u32 %v326, 4294901760
  %328 = vmatpush2.msra.mxu0 %v327
  %329 = vmatprep.subr.mxu0 0.0
  %v330 = vand.u32 %v40, 4294901760
  %v331 = vsub.f32 %v40, %v330
  %v332 = vand.u32 %v331, 4294901760
  %v333 = vsub.f32 %v331, %v332
  %v334 = vand.u32 %v333, 4294901760
  %335 = vmatpush2.msra.mxu0 %v334
  %336 = vmatprep.subr.mxu0 0.0
  %v337 = vand.u32 %v39, 4294901760
  %v338 = vsub.f32 %v39, %v337
  %v339 = vand.u32 %v338, 4294901760
  %v340 = vsub.f32 %v338, %v339
  %v341 = vand.u32 %v340, 4294901760
  %342 = vmatpush2.msra.mxu0 %v341
  %343 = vmatprep.subr.mxu0 0.0
  %v344 = vand.u32 %v38, 4294901760
  %v345 = vsub.f32 %v38, %v344
  %v346 = vand.u32 %v345, 4294901760
  %v347 = vsub.f32 %v345, %v346
  %v348 = vand.u32 %v347, 4294901760
  %349 = vmatpush2.msra.mxu0 %v348
  %350 = vmatprep.subr.mxu0 0.0
  %v351 = vand.u32 %v37, 4294901760
  %v352 = vsub.f32 %v37, %v351
  %v353 = vand.u32 %v352, 4294901760
  %v354 = vsub.f32 %v352, %v353
  %v355 = vand.u32 %v354, 4294901760
  %356 = vmatpush2.msra.mxu0 %v355
  %357 = vmatprep.subr.mxu0 0.0
  %v358 = vand.u32 %v36, 4294901760
  %v359 = vsub.f32 %v36, %v358
  %v360 = vand.u32 %v359, 4294901760
  %v361 = vsub.f32 %v359, %v360
  %v362 = vand.u32 %v361, 4294901760
  %363 = vmatpush2.msra.mxu0 %v362
  %364 = vmatprep.subr.mxu0 0.0
  %v365 = vand.u32 %v35, 4294901760
  %v366 = vsub.f32 %v35, %v365
  %v367 = vand.u32 %v366, 4294901760
  %v368 = vsub.f32 %v366, %v367
  %v369 = vand.u32 %v368, 4294901760
  %370 = vmatpush2.msra.mxu0 %v369
  %371 = vmatprep.subr.mxu0 0.0
  %v372 = vand.u32 %v34, 4294901760
  %v373 = vsub.f32 %v34, %v372
  %v374 = vand.u32 %v373, 4294901760
  %v375 = vsub.f32 %v373, %v374
  %v376 = vand.u32 %v375, 4294901760
  %377 = vmatpush2.msra.mxu0 %v376
  %378 = vmatprep.subr.mxu0 0.0
  %v379 = vand.u32 %v33, 4294901760
  %v380 = vsub.f32 %v33, %v379
  %v381 = vand.u32 %v380, 4294901760
  %v382 = vsub.f32 %v380, %v381
  %v383 = vand.u32 %v382, 4294901760
  %384 = vmatpush2.msra.mxu0 %v383
  %v385 = vand.u32 %v16, 4294901760
  %386 = vmatprep.mubr.f32.mxu0 %v385
  %v387 = vand.u32 %v15, 4294901760
  %388 = vmatmul.mubr.f32.gmra.mxu0 %v387
  %v389 = vpop.f32.mrf.mxu0
  %v390 = vadd.f32 %v158, %v389
  %v391 = vpop.f32.mrf.mxu0
  %392 = vdwg.mxu0
  %393 = vmatprep.subr.mxu0 0.0
  %v394 = vand.u32 %v32, 4294901760
  %v395 = vsub.f32 %v32, %v394
  %396 = vmatpush1.msra.mxu0 %v395
  %397 = vmatprep.subr.mxu0 0.0
  %v398 = vand.u32 %v31, 4294901760
  %v399 = vsub.f32 %v31, %v398
  %400 = vmatpush1.msra.mxu0 %v399
  %401 = vmatprep.subr.mxu0 0.0
  %v402 = vand.u32 %v30, 4294901760
  %v403 = vsub.f32 %v30, %v402
  %404 = vmatpush1.msra.mxu0 %v403
  %405 = vmatprep.subr.mxu0 0.0
  %v406 = vand.u32 %v29, 4294901760
  %v407 = vsub.f32 %v29, %v406
  %408 = vmatpush1.msra.mxu0 %v407
  %409 = vmatprep.subr.mxu0 0.0
  %v410 = vand.u32 %v28, 4294901760
  %v411 = vsub.f32 %v28, %v410
  %412 = vmatpush1.msra.mxu0 %v411
  %413 = vmatprep.subr.mxu0 0.0
  %v414 = vand.u32 %v27, 4294901760
  %v415 = vsub.f32 %v27, %v414
  %416 = vmatpush1.msra.mxu0 %v415
  %417 = vmatprep.subr.mxu0 0.0
  %v418 = vand.u32 %v26, 4294901760
  %v419 = vsub.f32 %v26, %v418
  %420 = vmatpush1.msra.mxu0 %v419
  %421 = vmatprep.subr.mxu0 0.0
  %v422 = vand.u32 %v25, 4294901760
  %v423 = vsub.f32 %v25, %v422
  %424 = vmatpush1.msra.mxu0 %v423
  %425 = vmatprep.subr.mxu0 0.0
  %v426 = vand.u32 %v24, 4294901760
  %v427 = vsub.f32 %v24, %v426
  %428 = vmatpush1.msra.mxu0 %v427
  %429 = vmatprep.subr.mxu0 0.0
  %v430 = vand.u32 %v23, 4294901760
  %v431 = vsub.f32 %v23, %v430
  %432 = vmatpush1.msra.mxu0 %v431
  %433 = vmatprep.subr.mxu0 0.0
  %v434 = vand.u32 %v22, 4294901760
  %v435 = vsub.f32 %v22, %v434
  %436 = vmatpush1.msra.mxu0 %v435
  %437 = vmatprep.subr.mxu0 0.0
  %v438 = vand.u32 %v21, 4294901760
  %v439 = vsub.f32 %v21, %v438
  %440 = vmatpush1.msra.mxu0 %v439
  %441 = vmatprep.subr.mxu0 0.0
  %v442 = vand.u32 %v20, 4294901760
  %v443 = vsub.f32 %v20, %v442
  %444 = vmatpush1.msra.mxu0 %v443
  %445 = vmatprep.subr.mxu0 0.0
  %v446 = vand.u32 %v19, 4294901760
  %v447 = vsub.f32 %v19, %v446
  %448 = vmatpush1.msra.mxu0 %v447
  %449 = vmatprep.subr.mxu0 0.0
  %v450 = vand.u32 %v18, 4294901760
  %v451 = vsub.f32 %v18, %v450
  %452 = vmatpush1.msra.mxu0 %v451
  %453 = vmatprep.subr.mxu0 0.0
  %v454 = vand.u32 %v17, 4294901760
  %v455 = vsub.f32 %v17, %v454
  %456 = vmatpush1.msra.mxu0 %v455
  %457 = vmatprep.subr.mxu0 0.0
  %v458 = vand.u32 %v48, 4294901760
  %v459 = vsub.f32 %v48, %v458
  %460 = vmatpush2.msra.mxu0 %v459
  %461 = vmatprep.subr.mxu0 0.0
  %v462 = vand.u32 %v47, 4294901760
  %v463 = vsub.f32 %v47, %v462
  %464 = vmatpush2.msra.mxu0 %v463
  %465 = vmatprep.subr.mxu0 0.0
  %v466 = vand.u32 %v46, 4294901760
  %v467 = vsub.f32 %v46, %v466
  %468 = vmatpush2.msra.mxu0 %v467
  %469 = vmatprep.subr.mxu0 0.0
  %v470 = vand.u32 %v45, 4294901760
  %v471 = vsub.f32 %v45, %v470
  %472 = vmatpush2.msra.mxu0 %v471
  %473 = vmatprep.subr.mxu0 0.0
  %v474 = vand.u32 %v44, 4294901760
  %v475 = vsub.f32 %v44, %v474
  %476 = vmatpush2.msra.mxu0 %v475
  %477 = vmatprep.subr.mxu0 0.0
  %v478 = vand.u32 %v43, 4294901760
  %v479 = vsub.f32 %v43, %v478
  %480 = vmatpush2.msra.mxu0 %v479
  %481 = vmatprep.subr.mxu0 0.0
  %v482 = vand.u32 %v42, 4294901760
  %v483 = vsub.f32 %v42, %v482
  %484 = vmatpush2.msra.mxu0 %v483
  %485 = vmatprep.subr.mxu0 0.0
  %v486 = vand.u32 %v41, 4294901760
  %v487 = vsub.f32 %v41, %v486
  %488 = vmatpush2.msra.mxu0 %v487
  %489 = vmatprep.subr.mxu0 0.0
  %v490 = vand.u32 %v40, 4294901760
  %v491 = vsub.f32 %v40, %v490
  %492 = vmatpush2.msra.mxu0 %v491
  %493 = vmatprep.subr.mxu0 0.0
  %v494 = vand.u32 %v39, 4294901760
  %v495 = vsub.f32 %v39, %v494
  %496 = vmatpush2.msra.mxu0 %v495
  %497 = vmatprep.subr.mxu0 0.0
  %v498 = vand.u32 %v38, 4294901760
  %v499 = vsub.f32 %v38, %v498
  %500 = vmatpush2.msra.mxu0 %v499
  %501 = vmatprep.subr.mxu0 0.0
  %v502 = vand.u32 %v37, 4294901760
  %v503 = vsub.f32 %v37, %v502
  %504 = vmatpush2.msra.mxu0 %v503
  %505 = vmatprep.subr.mxu0 0.0
  %v506 = vand.u32 %v36, 4294901760
  %v507 = vsub.f32 %v36, %v506
  %508 = vmatpush2.msra.mxu0 %v507
  %509 = vmatprep.subr.mxu0 0.0
  %v510 = vand.u32 %v35, 4294901760
  %v511 = vsub.f32 %v35, %v510
  %512 = vmatpush2.msra.mxu0 %v511
  %513 = vmatprep.subr.mxu0 0.0
  %v514 = vand.u32 %v34, 4294901760
  %v515 = vsub.f32 %v34, %v514
  %516 = vmatpush2.msra.mxu0 %v515
  %517 = vmatprep.subr.mxu0 0.0
  %v518 = vand.u32 %v33, 4294901760
  %v519 = vsub.f32 %v33, %v518
  %520 = vmatpush2.msra.mxu0 %v519
  %v521 = vand.u32 %v16, 4294901760
  %v522 = vsub.f32 %v16, %v521
  %523 = vmatprep.mubr.f32.mxu0 %v522
  %v524 = vand.u32 %v15, 4294901760
  %v525 = vsub.f32 %v15, %v524
  %526 = vmatmul.mubr.f32.gmra.mxu0 %v525
  %v527 = vpop.f32.mrf.mxu0
  %v528 = vadd.f32 %v390, %v527
  %v529 = vpop.f32.mrf.mxu0
  %530 = vdwg.mxu0
  %531 = vmatprep.subr.mxu0 0.0
  %v532 = vand.u32 %v32, 4294901760
  %533 = vmatpush1.msra.mxu0 %v532
  %534 = vmatprep.subr.mxu0 0.0
  %v535 = vand.u32 %v31, 4294901760
  %536 = vmatpush1.msra.mxu0 %v535
  %537 = vmatprep.subr.mxu0 0.0
  %v538 = vand.u32 %v30, 4294901760
  %539 = vmatpush1.msra.mxu0 %v538
  %540 = vmatprep.subr.mxu0 0.0
  %v541 = vand.u32 %v29, 4294901760
  %542 = vmatpush1.msra.mxu0 %v541
  %543 = vmatprep.subr.mxu0 0.0
  %v544 = vand.u32 %v28, 4294901760
  %545 = vmatpush1.msra.mxu0 %v544
  %546 = vmatprep.subr.mxu0 0.0
  %v547 = vand.u32 %v27, 4294901760
  %548 = vmatpush1.msra.mxu0 %v547
  %549 = vmatprep.subr.mxu0 0.0
  %v550 = vand.u32 %v26, 4294901760
  %551 = vmatpush1.msra.mxu0 %v550
  %552 = vmatprep.subr.mxu0 0.0
  %v553 = vand.u32 %v25, 4294901760
  %554 = vmatpush1.msra.mxu0 %v553
  %555 = vmatprep.subr.mxu0 0.0
  %v556 = vand.u32 %v24, 4294901760
  %557 = vmatpush1.msra.mxu0 %v556
  %558 = vmatprep.subr.mxu0 0.0
  %v559 = vand.u32 %v23, 4294901760
  %560 = vmatpush1.msra.mxu0 %v559
  %561 = vmatprep.subr.mxu0 0.0
  %v562 = vand.u32 %v22, 4294901760
  %563 = vmatpush1.msra.mxu0 %v562
  %564 = vmatprep.subr.mxu0 0.0
  %v565 = vand.u32 %v21, 4294901760
  %566 = vmatpush1.msra.mxu0 %v565
  %567 = vmatprep.subr.mxu0 0.0
  %v568 = vand.u32 %v20, 4294901760
  %569 = vmatpush1.msra.mxu0 %v568
  %570 = vmatprep.subr.mxu0 0.0
  %v571 = vand.u32 %v19, 4294901760
  %572 = vmatpush1.msra.mxu0 %v571
  %573 = vmatprep.subr.mxu0 0.0
  %v574 = vand.u32 %v18, 4294901760
  %575 = vmatpush1.msra.mxu0 %v574
  %576 = vmatprep.subr.mxu0 0.0
  %v577 = vand.u32 %v17, 4294901760
  %578 = vmatpush1.msra.mxu0 %v577
  %579 = vmatprep.subr.mxu0 0.0
  %v580 = vand.u32 %v48, 4294901760
  %581 = vmatpush2.msra.mxu0 %v580
  %582 = vmatprep.subr.mxu0 0.0
  %v583 = vand.u32 %v47, 4294901760
  %584 = vmatpush2.msra.mxu0 %v583
  %585 = vmatprep.subr.mxu0 0.0
  %v586 = vand.u32 %v46, 4294901760
  %587 = vmatpush2.msra.mxu0 %v586
  %588 = vmatprep.subr.mxu0 0.0
  %v589 = vand.u32 %v45, 4294901760
  %590 = vmatpush2.msra.mxu0 %v589
  %591 = vmatprep.subr.mxu0 0.0
  %v592 = vand.u32 %v44, 4294901760
  %593 = vmatpush2.msra.mxu0 %v592
  %594 = vmatprep.subr.mxu0 0.0
  %v595 = vand.u32 %v43, 4294901760
  %596 = vmatpush2.msra.mxu0 %v595
  %597 = vmatprep.subr.mxu0 0.0
  %v598 = vand.u32 %v42, 4294901760
  %599 = vmatpush2.msra.mxu0 %v598
  %600 = vmatprep.subr.mxu0 0.0
  %v601 = vand.u32 %v41, 4294901760
  %602 = vmatpush2.msra.mxu0 %v601
  %603 = vmatprep.subr.mxu0 0.0
  %v604 = vand.u32 %v40, 4294901760
  %605 = vmatpush2.msra.mxu0 %v604
  %606 = vmatprep.subr.mxu0 0.0
  %v607 = vand.u32 %v39, 4294901760
  %608 = vmatpush2.msra.mxu0 %v607
  %609 = vmatprep.subr.mxu0 0.0
  %v610 = vand.u32 %v38, 4294901760
  %611 = vmatpush2.msra.mxu0 %v610
  %612 = vmatprep.subr.mxu0 0.0
  %v613 = vand.u32 %v37, 4294901760
  %614 = vmatpush2.msra.mxu0 %v613
  %615 = vmatprep.subr.mxu0 0.0
  %v616 = vand.u32 %v36, 4294901760
  %617 = vmatpush2.msra.mxu0 %v616
  %618 = vmatprep.subr.mxu0 0.0
  %v619 = vand.u32 %v35, 4294901760
  %620 = vmatpush2.msra.mxu0 %v619
  %621 = vmatprep.subr.mxu0 0.0
  %v622 = vand.u32 %v34, 4294901760
  %623 = vmatpush2.msra.mxu0 %v622
  %624 = vmatprep.subr.mxu0 0.0
  %v625 = vand.u32 %v33, 4294901760
  %626 = vmatpush2.msra.mxu0 %v625
  %v627 = vand.u32 %v16, 4294901760
  %v628 = vsub.f32 %v16, %v627
  %v629 = vand.u32 %v628, 4294901760
  %630 = vmatprep.mubr.f32.mxu0 %v629
  %v631 = vand.u32 %v15, 4294901760
  %v632 = vsub.f32 %v15, %v631
  %v633 = vand.u32 %v632, 4294901760
  %634 = vmatmul.mubr.f32.gmra.mxu0 %v633
  %v635 = vpop.f32.mrf.mxu0
  %v636 = vadd.f32 %v528, %v635
  %v637 = vpop.f32.mrf.mxu0
  %638 = vdwg.mxu0
  %639 = vmatprep.subr.mxu0 0.0
  %v640 = vand.u32 %v32, 4294901760
  %v641 = vsub.f32 %v32, %v640
  %v642 = vand.u32 %v641, 4294901760
  %643 = vmatpush1.msra.mxu0 %v642
  %644 = vmatprep.subr.mxu0 0.0
  %v645 = vand.u32 %v31, 4294901760
  %v646 = vsub.f32 %v31, %v645
  %v647 = vand.u32 %v646, 4294901760
  %648 = vmatpush1.msra.mxu0 %v647
  %649 = vmatprep.subr.mxu0 0.0
  %v650 = vand.u32 %v30, 4294901760
  %v651 = vsub.f32 %v30, %v650
  %v652 = vand.u32 %v651, 4294901760
  %653 = vmatpush1.msra.mxu0 %v652
  %654 = vmatprep.subr.mxu0 0.0
  %v655 = vand.u32 %v29, 4294901760
  %v656 = vsub.f32 %v29, %v655
  %v657 = vand.u32 %v656, 4294901760
  %658 = vmatpush1.msra.mxu0 %v657
  %659 = vmatprep.subr.mxu0 0.0
  %v660 = vand.u32 %v28, 4294901760
  %v661 = vsub.f32 %v28, %v660
  %v662 = vand.u32 %v661, 4294901760
  %663 = vmatpush1.msra.mxu0 %v662
  %664 = vmatprep.subr.mxu0 0.0
  %v665 = vand.u32 %v27, 4294901760
  %v666 = vsub.f32 %v27, %v665
  %v667 = vand.u32 %v666, 4294901760
  %668 = vmatpush1.msra.mxu0 %v667
  %669 = vmatprep.subr.mxu0 0.0
  %v670 = vand.u32 %v26, 4294901760
  %v671 = vsub.f32 %v26, %v670
  %v672 = vand.u32 %v671, 4294901760
  %673 = vmatpush1.msra.mxu0 %v672
  %674 = vmatprep.subr.mxu0 0.0
  %v675 = vand.u32 %v25, 4294901760
  %v676 = vsub.f32 %v25, %v675
  %v677 = vand.u32 %v676, 4294901760
  %678 = vmatpush1.msra.mxu0 %v677
  %679 = vmatprep.subr.mxu0 0.0
  %v680 = vand.u32 %v24, 4294901760
  %v681 = vsub.f32 %v24, %v680
  %v682 = vand.u32 %v681, 4294901760
  %683 = vmatpush1.msra.mxu0 %v682
  %684 = vmatprep.subr.mxu0 0.0
  %v685 = vand.u32 %v23, 4294901760
  %v686 = vsub.f32 %v23, %v685
  %v687 = vand.u32 %v686, 4294901760
  %688 = vmatpush1.msra.mxu0 %v687
  %689 = vmatprep.subr.mxu0 0.0
  %v690 = vand.u32 %v22, 4294901760
  %v691 = vsub.f32 %v22, %v690
  %v692 = vand.u32 %v691, 4294901760
  %693 = vmatpush1.msra.mxu0 %v692
  %694 = vmatprep.subr.mxu0 0.0
  %v695 = vand.u32 %v21, 4294901760
  %v696 = vsub.f32 %v21, %v695
  %v697 = vand.u32 %v696, 4294901760
  %698 = vmatpush1.msra.mxu0 %v697
  %699 = vmatprep.subr.mxu0 0.0
  %v700 = vand.u32 %v20, 4294901760
  %v701 = vsub.f32 %v20, %v700
  %v702 = vand.u32 %v701, 4294901760
  %703 = vmatpush1.msra.mxu0 %v702
  %704 = vmatprep.subr.mxu0 0.0
  %v705 = vand.u32 %v19, 4294901760
  %v706 = vsub.f32 %v19, %v705
  %v707 = vand.u32 %v706, 4294901760
  %708 = vmatpush1.msra.mxu0 %v707
  %709 = vmatprep.subr.mxu0 0.0
  %v710 = vand.u32 %v18, 4294901760
  %v711 = vsub.f32 %v18, %v710
  %v712 = vand.u32 %v711, 4294901760
  %713 = vmatpush1.msra.mxu0 %v712
  %714 = vmatprep.subr.mxu0 0.0
  %v715 = vand.u32 %v17, 4294901760
  %v716 = vsub.f32 %v17, %v715
  %v717 = vand.u32 %v716, 4294901760
  %718 = vmatpush1.msra.mxu0 %v717
  %719 = vmatprep.subr.mxu0 0.0
  %v720 = vand.u32 %v48, 4294901760
  %v721 = vsub.f32 %v48, %v720
  %v722 = vand.u32 %v721, 4294901760
  %723 = vmatpush2.msra.mxu0 %v722
  %724 = vmatprep.subr.mxu0 0.0
  %v725 = vand.u32 %v47, 4294901760
  %v726 = vsub.f32 %v47, %v725
  %v727 = vand.u32 %v726, 4294901760
  %728 = vmatpush2.msra.mxu0 %v727
  %729 = vmatprep.subr.mxu0 0.0
  %v730 = vand.u32 %v46, 4294901760
  %v731 = vsub.f32 %v46, %v730
  %v732 = vand.u32 %v731, 4294901760
  %733 = vmatpush2.msra.mxu0 %v732
  %734 = vmatprep.subr.mxu0 0.0
  %v735 = vand.u32 %v45, 4294901760
  %v736 = vsub.f32 %v45, %v735
  %v737 = vand.u32 %v736, 4294901760
  %738 = vmatpush2.msra.mxu0 %v737
  %739 = vmatprep.subr.mxu0 0.0
  %v740 = vand.u32 %v44, 4294901760
  %v741 = vsub.f32 %v44, %v740
  %v742 = vand.u32 %v741, 4294901760
  %743 = vmatpush2.msra.mxu0 %v742
  %744 = vmatprep.subr.mxu0 0.0
  %v745 = vand.u32 %v43, 4294901760
  %v746 = vsub.f32 %v43, %v745
  %v747 = vand.u32 %v746, 4294901760
  %748 = vmatpush2.msra.mxu0 %v747
  %749 = vmatprep.subr.mxu0 0.0
  %v750 = vand.u32 %v42, 4294901760
  %v751 = vsub.f32 %v42, %v750
  %v752 = vand.u32 %v751, 4294901760
  %753 = vmatpush2.msra.mxu0 %v752
  %754 = vmatprep.subr.mxu0 0.0
  %v755 = vand.u32 %v41, 4294901760
  %v756 = vsub.f32 %v41, %v755
  %v757 = vand.u32 %v756, 4294901760
  %758 = vmatpush2.msra.mxu0 %v757
  %759 = vmatprep.subr.mxu0 0.0
  %v760 = vand.u32 %v40, 4294901760
  %v761 = vsub.f32 %v40, %v760
  %v762 = vand.u32 %v761, 4294901760
  %763 = vmatpush2.msra.mxu0 %v762
  %764 = vmatprep.subr.mxu0 0.0
  %v765 = vand.u32 %v39, 4294901760
  %v766 = vsub.f32 %v39, %v765
  %v767 = vand.u32 %v766, 4294901760
  %768 = vmatpush2.msra.mxu0 %v767
  %769 = vmatprep.subr.mxu0 0.0
  %v770 = vand.u32 %v38, 4294901760
  %v771 = vsub.f32 %v38, %v770
  %v772 = vand.u32 %v771, 4294901760
  %773 = vmatpush2.msra.mxu0 %v772
  %774 = vmatprep.subr.mxu0 0.0
  %v775 = vand.u32 %v37, 4294901760
  %v776 = vsub.f32 %v37, %v775
  %v777 = vand.u32 %v776, 4294901760
  %778 = vmatpush2.msra.mxu0 %v777
  %779 = vmatprep.subr.mxu0 0.0
  %v780 = vand.u32 %v36, 4294901760
  %v781 = vsub.f32 %v36, %v780
  %v782 = vand.u32 %v781, 4294901760
  %783 = vmatpush2.msra.mxu0 %v782
  %784 = vmatprep.subr.mxu0 0.0
  %v785 = vand.u32 %v35, 4294901760
  %v786 = vsub.f32 %v35, %v785
  %v787 = vand.u32 %v786, 4294901760
  %788 = vmatpush2.msra.mxu0 %v787
  %789 = vmatprep.subr.mxu0 0.0
  %v790 = vand.u32 %v34, 4294901760
  %v791 = vsub.f32 %v34, %v790
  %v792 = vand.u32 %v791, 4294901760
  %793 = vmatpush2.msra.mxu0 %v792
  %794 = vmatprep.subr.mxu0 0.0
  %v795 = vand.u32 %v33, 4294901760
  %v796 = vsub.f32 %v33, %v795
  %v797 = vand.u32 %v796, 4294901760
  %798 = vmatpush2.msra.mxu0 %v797
  %v799 = vand.u32 %v16, 4294901760
  %800 = vmatprep.mubr.f32.mxu0 %v799
  %v801 = vand.u32 %v15, 4294901760
  %802 = vmatmul.mubr.f32.gmra.mxu0 %v801
  %v803 = vpop.f32.mrf.mxu0
  %v804 = vadd.f32 %v636, %v803
  %v805 = vpop.f32.mrf.mxu0
  %806 = vdwg.mxu0
  %807 = vmatprep.subr.mxu0 0.0
  %v808 = vand.u32 %v32, 4294901760
  %809 = vmatpush1.msra.mxu0 %v808
  %810 = vmatprep.subr.mxu0 0.0
  %v811 = vand.u32 %v31, 4294901760
  %812 = vmatpush1.msra.mxu0 %v811
  %813 = vmatprep.subr.mxu0 0.0
  %v814 = vand.u32 %v30, 4294901760
  %815 = vmatpush1.msra.mxu0 %v814
  %816 = vmatprep.subr.mxu0 0.0
  %v817 = vand.u32 %v29, 4294901760
  %818 = vmatpush1.msra.mxu0 %v817
  %819 = vmatprep.subr.mxu0 0.0
  %v820 = vand.u32 %v28, 4294901760
  %821 = vmatpush1.msra.mxu0 %v820
  %822 = vmatprep.subr.mxu0 0.0
  %v823 = vand.u32 %v27, 4294901760
  %824 = vmatpush1.msra.mxu0 %v823
  %825 = vmatprep.subr.mxu0 0.0
  %v826 = vand.u32 %v26, 4294901760
  %827 = vmatpush1.msra.mxu0 %v826
  %828 = vmatprep.subr.mxu0 0.0
  %v829 = vand.u32 %v25, 4294901760
  %830 = vmatpush1.msra.mxu0 %v829
  %831 = vmatprep.subr.mxu0 0.0
  %v832 = vand.u32 %v24, 4294901760
  %833 = vmatpush1.msra.mxu0 %v832
  %834 = vmatprep.subr.mxu0 0.0
  %v835 = vand.u32 %v23, 4294901760
  %836 = vmatpush1.msra.mxu0 %v835
  %837 = vmatprep.subr.mxu0 0.0
  %v838 = vand.u32 %v22, 4294901760
  %839 = vmatpush1.msra.mxu0 %v838
  %840 = vmatprep.subr.mxu0 0.0
  %v841 = vand.u32 %v21, 4294901760
  %842 = vmatpush1.msra.mxu0 %v841
  %843 = vmatprep.subr.mxu0 0.0
  %v844 = vand.u32 %v20, 4294901760
  %845 = vmatpush1.msra.mxu0 %v844
  %846 = vmatprep.subr.mxu0 0.0
  %v847 = vand.u32 %v19, 4294901760
  %848 = vmatpush1.msra.mxu0 %v847
  %849 = vmatprep.subr.mxu0 0.0
  %v850 = vand.u32 %v18, 4294901760
  %851 = vmatpush1.msra.mxu0 %v850
  %852 = vmatprep.subr.mxu0 0.0
  %v853 = vand.u32 %v17, 4294901760
  %854 = vmatpush1.msra.mxu0 %v853
  %855 = vmatprep.subr.mxu0 0.0
  %v856 = vand.u32 %v48, 4294901760
  %857 = vmatpush2.msra.mxu0 %v856
  %858 = vmatprep.subr.mxu0 0.0
  %v859 = vand.u32 %v47, 4294901760
  %860 = vmatpush2.msra.mxu0 %v859
  %861 = vmatprep.subr.mxu0 0.0
  %v862 = vand.u32 %v46, 4294901760
  %863 = vmatpush2.msra.mxu0 %v862
  %864 = vmatprep.subr.mxu0 0.0
  %v865 = vand.u32 %v45, 4294901760
  %866 = vmatpush2.msra.mxu0 %v865
  %867 = vmatprep.subr.mxu0 0.0
  %v868 = vand.u32 %v44, 4294901760
  %869 = vmatpush2.msra.mxu0 %v868
  %870 = vmatprep.subr.mxu0 0.0
  %v871 = vand.u32 %v43, 4294901760
  %872 = vmatpush2.msra.mxu0 %v871
  %873 = vmatprep.subr.mxu0 0.0
  %v874 = vand.u32 %v42, 4294901760
  %875 = vmatpush2.msra.mxu0 %v874
  %876 = vmatprep.subr.mxu0 0.0
  %v877 = vand.u32 %v41, 4294901760
  %878 = vmatpush2.msra.mxu0 %v877
  %879 = vmatprep.subr.mxu0 0.0
  %v880 = vand.u32 %v40, 4294901760
  %881 = vmatpush2.msra.mxu0 %v880
  %882 = vmatprep.subr.mxu0 0.0
  %v883 = vand.u32 %v39, 4294901760
  %884 = vmatpush2.msra.mxu0 %v883
  %885 = vmatprep.subr.mxu0 0.0
  %v886 = vand.u32 %v38, 4294901760
  %887 = vmatpush2.msra.mxu0 %v886
  %888 = vmatprep.subr.mxu0 0.0
  %v889 = vand.u32 %v37, 4294901760
  %890 = vmatpush2.msra.mxu0 %v889
  %891 = vmatprep.subr.mxu0 0.0
  %v892 = vand.u32 %v36, 4294901760
  %893 = vmatpush2.msra.mxu0 %v892
  %894 = vmatprep.subr.mxu0 0.0
  %v895 = vand.u32 %v35, 4294901760
  %896 = vmatpush2.msra.mxu0 %v895
  %897 = vmatprep.subr.mxu0 0.0
  %v898 = vand.u32 %v34, 4294901760
  %899 = vmatpush2.msra.mxu0 %v898
  %900 = vmatprep.subr.mxu0 0.0
  %v901 = vand.u32 %v33, 4294901760
  %902 = vmatpush2.msra.mxu0 %v901
  %v903 = vand.u32 %v16, 4294901760
  %904 = vmatprep.mubr.f32.mxu0 %v903
  %v905 = vand.u32 %v15, 4294901760
  %906 = vmatmul.mubr.f32.gmra.mxu0 %v905
  %v907 = vpop.f32.mrf.mxu0
  %v908 = vadd.f32 %v804, %v907
  %v909 = vpop.f32.mrf.mxu0
  %910 = vdwg.mxu0
  %s911 = sld [smem:[#allocation2]]
  %v912 = vstv %s911
  %v913 = vadd.f32 %v908, %v912
  %vm914 = vcmask 64512
  %915 = vst.msk [vmem:[%s3] sm:$0xff] %vm914, %v913
  // Predicated region
  $region14: #{perceptron_forward.1} parent=0 // pred_check
    _
  $region15: #{perceptron_forward.1} parent=0 // pred_check_branch
    %917 = sbr.rel (0) target = $region17
  $region16: #{perceptron_forward.1} parent=0 // pred_region
    _
  $region17: #{perceptron_forward.1} parent=0 // pred_fallthru
    _
  // Predicated region
  $region18: #{perceptron_forward.1} parent=0 // pred_check
    _
  $region19: #{perceptron_forward.1} parent=0 // pred_check_branch
    %919 = sbr.rel (0) target = $region21
  $region20: #{perceptron_forward.1} parent=0 // pred_region
    _
  $region21: #{perceptron_forward.1} parent=0 // pred_fallthru
    _

</llo_original>
